<compile_context>
chip_gen: v6e
topology: v6e:2x2x1
jax: 0.10.0
libtpu: 0.0.40
codegen_flags: <defaults>
</compile_context>

<pallas_src>
import functools

import jax
import jax.numpy as jnp
from jax.experimental import pallas as pl
from jax.experimental.pallas import tpu as pltpu


def _round_up(x, m):
    return ((x + m - 1) // m) * m


def _vmem_capacity_bytes():
    """Physical VMEM per core (generation aware); conservative fallback."""
    try:
        info = pltpu.get_tpu_info()
        for name in ("vmem_capacity_bytes", "vmem_bytes"):
            cap = getattr(info, name, None)
            if cap:
                return int(cap)
    except Exception:
        pass
    return 64 * 1024 * 1024  # assume the smallest current generation (v7x)


def _conv1x1_bn_relu_kernel(x_ref, w_ref, shift_ref, o_ref):
    # x_ref:     (C_in, block_hw)    activation tile (HW on the lane axis)
    # w_ref:     (block_co, C_in)    BN-scale-folded weight (grid-resident)
    # shift_ref: (block_co, 1)       folded BN shift = beta - mean * scale
    # o_ref:     (block_co, block_hw)
    y = jnp.dot(w_ref[...], x_ref[...], preferred_element_type=jnp.float32)
    y = y + shift_ref[...]
    o_ref[...] = jnp.maximum(y, 0.0).astype(o_ref.dtype)


@functools.partial(
    jax.jit,
    static_argnames=("stride", "eps", "block_hw_max", "compute_dtype",
                     "out_dtype"))
def conv1x1_bn_relu(x, weight, gamma, beta, running_mean, running_var,
                    *, stride=1, eps=1e-5, block_hw_max=2048,
                    compute_dtype=None, out_dtype=None):
    """Forward of Conv1x1: conv(1x1, bias=False, groups=1) -> BN (eval) -> ReLU.

    Args:
      x:      (N, C_in, H, W)  NCHW (PyTorch convention).
      weight: (C_out, C_in, 1, 1) conv weight (groups=1).
      gamma, beta, running_mean, running_var: (C_out,) BN parameters.
      compute_dtype: matmul input dtype.  Defaults to x.dtype so no extra
        conversion HBM pass is paid; pass jnp.bfloat16 only when the producer
        already delivers bf16 (or the extra pass is acceptable).
      out_dtype: output dtype.  Defaults to x.dtype (bf16 pipelines keep a
        bf16 write stream).
    Returns:
      (N, C_out, H_out, W_out) NCHW.
    """
    n, c_in, h, w = x.shape
    c_out = weight.shape[0]

    if compute_dtype is None:
        compute_dtype = x.dtype
    if out_dtype is None:
        out_dtype = x.dtype
    compute_dtype = jnp.dtype(compute_dtype)
    out_dtype = jnp.dtype(out_dtype)

    # 1x1 conv with stride s == spatial subsampling then a pointwise matmul.
    # TODO(synk): fold the stride subsampling into the DMA/index_map (strided
    # row fetch + in-kernel lane subsample) instead of this wrapper-side slice;
    # the slice costs an extra HBM pass when stride > 1.
    if stride != 1:
        x = x[:, :, ::stride, ::stride]
    h_out, w_out = x.shape[2], x.shape[3]
    hw = h_out * w_out

    # Keep NCHW: flatten spatial only -> (N, C_in, HW).  No transposes, no pad.
    x3 = x.reshape(n, c_in, hw)
    if x3.dtype != compute_dtype:
        x3 = x3.astype(compute_dtype)

    # Fold BN (eval / running statistics): scale goes into the weight (the conv
    # has no bias), shift stays as the kernel epilogue add.
    inv_std = jax.lax.rsqrt(running_var.astype(jnp.float32) + eps)
    scale = gamma.astype(jnp.float32) * inv_std                      # (C_out,)
    shift = (beta.astype(jnp.float32)
             - running_mean.astype(jnp.float32) * scale).reshape(c_out, 1)
    w2d = weight.reshape(c_out, c_in).astype(jnp.float32)
    w_scaled = (w2d * scale[:, None]).astype(compute_dtype)

    x_isz = compute_dtype.itemsize
    o_isz = out_dtype.itemsize
    w_isz = compute_dtype.itemsize

    # ---- Tile selection with a generation-aware VMEM budget -----------------
    vmem_cap = _vmem_capacity_bytes()
    if vmem_cap >= 96 * 1024 * 1024:       # v5e / v6e: 128 MiB physical VMEM
        stream_budget = 64 * 1024 * 1024
        vmem_cap_limit = 96 * 1024 * 1024
    else:                                  # v7x: 64 MiB physical VMEM
        stream_budget = 24 * 1024 * 1024
        vmem_cap_limit = 48 * 1024 * 1024

    # Lane tile: as large as possible, multiple of 128, never larger than HW
    # (ragged last tile handled by Pallas boundary masking).
    if hw >= 128:
        block_hw = min(_round_up(block_hw_max, 128), (hw // 128) * 128)
        block_hw = max(128, block_hw)
    else:
        block_hw = hw                      # single full-extent (masked) block
    block_co = c_out                       # default: full C_out resident

    def _bytes(bhw, bco):
        # Double-buffered x + out streams plus the (conservatively counted as
        # double-buffered) grid-resident weight / shift tiles.
        return (2 * bhw * c_in * x_isz
                + 2 * bhw * bco * o_isz
                + 2 * (bco * c_in * w_isz + bco * 4))

    while _bytes(block_hw, block_co) > stream_budget:
        if block_hw > 512:
            block_hw = max(512, ((block_hw // 2) // 128) * 128)
        else:
            # Prefer tiling C_out over shrinking block_hw below 512 lanes: it
            # keeps DMA rows long and output stores lane-dense.
            new_co = _round_up(max(128, block_co // 2), 128)
            if new_co < block_co:
                block_co = new_co
            elif block_hw > 128:
                block_hw = max(128, ((block_hw // 2) // 128) * 128)
            else:
                break

    # Balance the HW tiling (same tile count, smaller tail waste); never grows.
    if hw >= 128:
        num_hw = pl.cdiv(hw, block_hw)
        block_hw = min(block_hw,
                       max(128, _round_up(pl.cdiv(hw, num_hw), 128)))

    grid = (n, pl.cdiv(c_out, block_co), pl.cdiv(hw, block_hw))

    vmem_need = _bytes(block_hw, block_co)
    vmem_limit = int(min(max(vmem_need + vmem_need // 2, 32 * 1024 * 1024),
                         vmem_cap_limit))

    out3 = pl.pallas_call(
        _conv1x1_bn_relu_kernel,
        out_shape=jax.ShapeDtypeStruct((n, c_out, hw), out_dtype),
        grid=grid,
        in_specs=[
            pl.BlockSpec((None, c_in, block_hw), lambda b, co, t: (b, 0, t)),
            pl.BlockSpec((block_co, c_in), lambda b, co, t: (co, 0)),
            pl.BlockSpec((block_co, 1), lambda b, co, t: (co, 0)),
        ],
        out_specs=pl.BlockSpec((None, block_co, block_hw),
                               lambda b, co, t: (b, co, t)),
        compiler_params=pltpu.CompilerParams(
            dimension_semantics=("parallel", "parallel", "parallel"),
            vmem_limit_bytes=vmem_limit),
    )(x3, w_scaled, shift)

    return out3.reshape(n, c_out, h_out, w_out)


def _reference(x, weight, gamma, beta, running_mean, running_var,
               *, stride=1, eps=1e-5):
    """Plain-JAX reference of the PyTorch forward (eval-mode BN)."""
    y = jax.lax.conv_general_dilated(
        x.astype(jnp.float32), weight.astype(jnp.float32),
        window_strides=(stride, stride), padding="VALID",
        dimension_numbers=("NCHW", "OIHW", "NCHW"))
    inv_std = 1.0 / jnp.sqrt(running_var + eps)
    s = (gamma * inv_std).reshape(1, -1, 1, 1)
    b = (beta - running_mean * gamma * inv_std).reshape(1, -1, 1, 1)
    return jnp.maximum(y * s + b, 0.0)


if __name__ == "__main__":
    # TODO(synk): BatchNorm is implemented in eval mode (running statistics);
    # training-mode batch statistics are not computed in the kernel.
    # TODO(synk): groups > 1 (grouped 1x1 conv) is not implemented; the module
    # default groups=1 is covered.
    key = jax.random.PRNGKey(0)
    k_x, k_w, k_g, k_b, k_m, k_v = jax.random.split(key, 6)

    N, C_IN, C_OUT = 2, 4, 8
    weight = jax.random.normal(k_w, (C_OUT, C_IN, 1, 1), dtype=jnp.float32) * 0.1
    gamma = jax.random.uniform(k_g, (C_OUT,), minval=0.5, maxval=1.5)
    beta = jax.random.normal(k_b, (C_OUT,)) * 0.1
    running_mean = jax.random.normal(k_m, (C_OUT,)) * 0.1
    running_var = jax.random.uniform(k_v, (C_OUT,), minval=0.5, maxval=1.5)

    cases = [
        dict(h=16, w=16, stride=1, block_hw_max=2048),  # HW multiple of 128
        dict(h=15, w=15, stride=1, block_hw_max=128),   # ragged multi-tile HW
        dict(h=16, w=16, stride=2, block_hw_max=2048),  # strided 1x1 conv
    ]
    for c in cases:
        x = jax.random.normal(k_x, (N, C_IN, c["h"], c["w"]), dtype=jnp.float32)
        out = conv1x1_bn_relu(x, weight, gamma, beta, running_mean, running_var,
                              stride=c["stride"], block_hw_max=c["block_hw_max"])
        out = jax.block_until_ready(out)
        ref = _reference(x, weight, gamma, beta, running_mean, running_var,
                         stride=c["stride"])
        assert out.shape == ref.shape, (out.shape, ref.shape)
        assert jnp.allclose(out, ref, atol=1e-5, rtol=1e-5), (
            c, float(jnp.max(jnp.abs(out - ref))))
    print("KERNEL_OK")
</pallas_src>

<mosaic_0001>
module attributes {stable_mosaic.version = 11 : i64} {
  func.func @_conv1x1_bn_relu_kernel(%arg0: i32, %arg1: i32, %arg2: i32, %arg3: memref<1x4x256xf32, #tpu.memory_space<vmem>>, %arg4: memref<8x4xf32, #tpu.memory_space<vmem>>, %arg5: memref<8x1xf32, #tpu.memory_space<vmem>>, %arg6: memref<1x8x256xf32, #tpu.memory_space<vmem>>) attributes {dimension_semantics = [#tpu.dimension_semantics<parallel>, #tpu.dimension_semantics<parallel>, #tpu.dimension_semantics<parallel>], iteration_bounds = array<i64: 2, 1, 1>, scalar_prefetch = 0 : i64, scratch_operands = 0 : i64, tpu.core_type = #tpu.core_type<tc>, window_params = [{transform_indices = @transform_0, window_bounds = array<i64: 1, 4, 256>}, {transform_indices = @transform_1, window_bounds = array<i64: 8, 4>}, {transform_indices = @transform_2, window_bounds = array<i64: 8, 1>}, {transform_indices = @transform_3, window_bounds = array<i64: 1, 8, 256>}]} {
    %c0 = arith.constant 0 : index
    %c0_0 = arith.constant 0 : index
    %0 = vector.load %arg4[%c0, %c0_0] : memref<8x4xf32, #tpu.memory_space<vmem>>, vector<8x4xf32>
    %c0_1 = arith.constant 0 : index
    %c0_2 = arith.constant 0 : index
    %c0_3 = arith.constant 0 : index
    %1 = vector.load %arg3[%c0_1, %c0_2, %c0_3] : memref<1x4x256xf32, #tpu.memory_space<vmem>>, vector<1x4x256xf32>
    %2 = vector.shape_cast %1 : vector<1x4x256xf32> to vector<4x256xf32>
    %cst = arith.constant dense<0.000000e+00> : vector<8x256xf32>
    %3 = tpu.matmul %0, %2, %cst {dimension_numbers = #tpu.dot_dimension_numbers<[1], [0], [0], [1], [0, 0, 1, 1], [], []>} : vector<8x4xf32>, vector<4x256xf32>, vector<8x256xf32> -> vector<8x256xf32>
    %c0_4 = arith.constant 0 : index
    %c0_5 = arith.constant 0 : index
    %4 = vector.load %arg5[%c0_4, %c0_5] : memref<8x1xf32, #tpu.memory_space<vmem>>, vector<8x1xf32>
    %5 = vector.broadcast %4 : vector<8x1xf32> to vector<8x256xf32>
    %6 = arith.addf %3, %5 : vector<8x256xf32>
    %cst_6 = arith.constant 0.000000e+00 : f32
    %7 = vector.broadcast %cst_6 : f32 to vector<8x256xf32>
    %8 = arith.maximumf %6, %7 : vector<8x256xf32>
    %c0_7 = arith.constant 0 : index
    %c0_8 = arith.constant 0 : index
    %c0_9 = arith.constant 0 : index
    %9 = vector.load %arg6[%c0_7, %c0_8, %c0_9] : memref<1x8x256xf32, #tpu.memory_space<vmem>>, vector<1x8x256xf32>
    %10 = vector.shape_cast %9 : vector<1x8x256xf32> to vector<8x256xf32>
    %11 = vector.shape_cast %8 : vector<8x256xf32> to vector<1x8x256xf32>
    tpu.vector_store %arg6[%c0_7, %c0_8, %c0_9], %11 {strides = array<i32>} : memref<1x8x256xf32, #tpu.memory_space<vmem>>, vector<1x8x256xf32>,
    return
  }
  func.func @transform_0(%arg0: i32, %arg1: i32, %arg2: i32) -> (i32, i32, i32) {
    %c0_i32 = arith.constant 0 : i32
    %c0_i32_0 = arith.constant 0 : i32
    return %arg0, %c0_i32, %arg2 : i32, i32, i32
  }
  func.func @transform_1(%arg0: i32, %arg1: i32, %arg2: i32) -> (i32, i32) {
    %c0_i32 = arith.constant 0 : i32
    %c0_i32_0 = arith.constant 0 : i32
    return %arg1, %c0_i32 : i32, i32
  }
  func.func @transform_2(%arg0: i32, %arg1: i32, %arg2: i32) -> (i32, i32) {
    %c0_i32 = arith.constant 0 : i32
    %c0_i32_0 = arith.constant 0 : i32
    return %arg1, %c0_i32 : i32, i32
  }
  func.func @transform_3(%arg0: i32, %arg1: i32, %arg2: i32) -> (i32, i32, i32) {
    %c0_i32 = arith.constant 0 : i32
    return %arg0, %arg1, %arg2 : i32, i32, i32
  }
}

</mosaic_0001>

<llo_original>
// kernel: conv1x1_bn_relu.1
$region0: #{conv1x1_bn_relu.1}
  #allocation0 [shape = 'u32[]', space=smem, size = 0x4, offset = 0x4, fixed_abs, tag = 'smem constant byte address 0x4 - core index']
  #allocation1 [shape = 'u32[144,128]{1,0:T(1,128)}', space=vmem, size = 0x12000, scoped, tag = 'internal scratch']
  %s0 = inlined_call_operand.vmem [shape: f32[2,4,256], index: 0, kind: input, shape index: {}]
  %s1 = inlined_call_operand.vmem [shape: f32[8,4], index: 1, kind: input, shape index: {}]
  %s2 = inlined_call_operand.vmem [shape: f32[8,1], index: 2, kind: input, shape index: {}]
  %s3 = inlined_call_operand.vmem [shape: f32[2,8,256], index: 3, kind: output, shape index: {}]
  %s4 = sld [smem:[#allocation0]]
  $region45: #{conv1x1_bn_relu.1} parent=0
    _
  %s6 = ssub.s32 1, %s4
  %s7 = scalar_select 0, %s6, %s4
  loop: start=0, step=1, limit=4
  $region2: #{conv1x1_bn_relu.1} parent=0 // loop_pre_header
    _
  $region3: #{conv1x1_bn_relu.1} parent=0 // loop_header
    %s9 = sphi 0, %s13
    %p10 = scmp.ge.s32.totalorder %s9, 4
    %s16 = sphi 0, %s35
    %s17 = sphi 0, %s31
    %s18 = sphi 0, %s27
    %s19 = sphi 0, %s16
    %s20 = sphi 0, %s17
    %s21 = sphi 0, %s18
    %s22 = sphi 0, %s19
    %s23 = sphi 0, %s20
    %s24 = sphi 0, %s21
    %s40 = sphi 0, %s42
    %s43 = sphi 0, %s40
    %s44 = sphi 0, %s43
    %s60 = sphi 0, %s44
    %s66 = sphi 0, %s68
    %s69 = sphi 0, %s66
    %s70 = sphi 0, %s69
    %s86 = sphi 0, %s70
    %s92 = sphi 0, %s94
    %s95 = sphi 0, %s92
    %s96 = sphi 0, %s95
    %s112 = sphi 0, %s96
    %s122 = sphi 0, %s124
    %s125 = sphi 0, %s122
    %s126 = sphi 0, %s125
    %s142 = sphi 0, %s126
  $region4: #{conv1x1_bn_relu.1} parent=0 // loop_header_branch
    %12 = sbr.rel (%p10) target = $region8
  $region5: #{conv1x1_bn_relu.1} parent=0 // loop_body
    %s14 = ssub.s32 %s9, 1
    %s15 = ssub.s32 %s9, 2
    %s25 = sadd.s32 1, %s18
    %p26 = scmp.ge.s32.totalorder %s25, 1
    %s27 = scalar_select %p26, 0, %s25
    %s28 = sadd.s32 1, %s17
    %s29 = scalar_select %p26, %s28, %s17
    %p30 = scmp.ge.s32.totalorder %s29, 1
    %s31 = scalar_select %p30, 0, %s29
    %s32 = sadd.s32 1, %s16
    %s33 = scalar_select %p30, %s32, %s16
    %p34 = scmp.ge.s32.totalorder %s33, 2
    %s35 = scalar_select %p34, 0, %s33
    %s36 = ssub.s32 %s16, %s35
    %s37 = ssub.s32 %s18, %s27
    %s38 = sor.u32 %s36, %s37
    %p39 = scmp.eq.s32.totalorder %s38, 0
    %s41 = sadd.s32 %s40, 1
    %s42 = scalar_select %p39, %s40, %s41
    %p45 = pneg %p39
    %p46 = scmp.eq.s32.totalorder %s9, 1
    %p47 = por %p45, %p46
    %p48 = scmp.ne.s32.totalorder %s40, %s43
    %p49 = scmp.eq.s32.totalorder %s9, 0
    %p50 = por %p48, %p49
    %p51 = scmp.ne.s32.totalorder %s40, %s43
    %p52 = scmp.eq.s32.totalorder %s14, 1
    %p53 = por %p51, %p52
    %p54 = scmp.ne.s32.totalorder %s43, %s44
    %p55 = scmp.eq.s32.totalorder %s14, 0
    %p56 = por %p54, %p55
    %p57 = scmp.ne.s32.totalorder %s43, %s44
    %p58 = scmp.eq.s32.totalorder %s15, 1
    %p59 = por %p57, %p58
    %p61 = scmp.ne.s32.totalorder %s44, %s60
    %p62 = scmp.eq.s32.totalorder %s15, 0
    %p63 = por %p61, %p62
    %s64 = ssub.s32 %s17, %s31
    %p65 = scmp.eq.s32.totalorder %s64, 0
    %s67 = sadd.s32 %s66, 1
    %s68 = scalar_select %p65, %s66, %s67
    %p71 = pneg %p65
    %p72 = scmp.eq.s32.totalorder %s9, 1
    %p73 = por %p71, %p72
    %p74 = scmp.ne.s32.totalorder %s66, %s69
    %p75 = scmp.eq.s32.totalorder %s9, 0
    %p76 = por %p74, %p75
    %p77 = scmp.ne.s32.totalorder %s66, %s69
    %p78 = scmp.eq.s32.totalorder %s14, 1
    %p79 = por %p77, %p78
    %p80 = scmp.ne.s32.totalorder %s69, %s70
    %p81 = scmp.eq.s32.totalorder %s14, 0
    %p82 = por %p80, %p81
    %p83 = scmp.ne.s32.totalorder %s69, %s70
    %p84 = scmp.eq.s32.totalorder %s15, 1
    %p85 = por %p83, %p84
    %p87 = scmp.ne.s32.totalorder %s70, %s86
    %p88 = scmp.eq.s32.totalorder %s15, 0
    %p89 = por %p87, %p88
    %s90 = ssub.s32 %s17, %s31
    %p91 = scmp.eq.s32.totalorder %s90, 0
    %s93 = sadd.s32 %s92, 1
    %s94 = scalar_select %p91, %s92, %s93
    %p97 = pneg %p91
    %p98 = scmp.eq.s32.totalorder %s9, 1
    %p99 = por %p97, %p98
    %p100 = scmp.ne.s32.totalorder %s92, %s95
    %p101 = scmp.eq.s32.totalorder %s9, 0
    %p102 = por %p100, %p101
    %p103 = scmp.ne.s32.totalorder %s92, %s95
    %p104 = scmp.eq.s32.totalorder %s14, 1
    %p105 = por %p103, %p104
    %p106 = scmp.ne.s32.totalorder %s95, %s96
    %p107 = scmp.eq.s32.totalorder %s14, 0
    %p108 = por %p106, %p107
    %p109 = scmp.ne.s32.totalorder %s95, %s96
    %p110 = scmp.eq.s32.totalorder %s15, 1
    %p111 = por %p109, %p110
    %p113 = scmp.ne.s32.totalorder %s96, %s112
    %p114 = scmp.eq.s32.totalorder %s15, 0
    %p115 = por %p113, %p114
    %s116 = ssub.s32 %s16, %s35
    %s117 = ssub.s32 %s17, %s31
    %s118 = sor.u32 %s116, %s117
    %s119 = ssub.s32 %s18, %s27
    %s120 = sor.u32 %s118, %s119
    %p121 = scmp.eq.s32.totalorder %s120, 0
    %s123 = sadd.s32 %s122, 1
    %s124 = scalar_select %p121, %s122, %s123
    %p127 = pneg %p121
    %p128 = scmp.eq.s32.totalorder %s9, 1
    %p129 = por %p127, %p128
    %p130 = scmp.ne.s32.totalorder %s122, %s125
    %p131 = scmp.eq.s32.totalorder %s9, 0
    %p132 = por %p130, %p131
    %p133 = scmp.ne.s32.totalorder %s122, %s125
    %p134 = scmp.eq.s32.totalorder %s14, 1
    %p135 = por %p133, %p134
    %p136 = scmp.ne.s32.totalorder %s125, %s126
    %p137 = scmp.eq.s32.totalorder %s14, 0
    %p138 = por %p136, %p137
    %p139 = scmp.ne.s32.totalorder %s125, %s126
    %p140 = scmp.eq.s32.totalorder %s15, 1
    %p141 = por %p139, %p140
    %p143 = scmp.ne.s32.totalorder %s126, %s142
    %p144 = scmp.eq.s32.totalorder %s15, 0
    %p145 = por %p143, %p144
    %p146 = scmp.le.s32.totalorder 1, %s9
    %p147 = scmp.lt.s32.totalorder %s9, 3
    %p148 = pnand %p146, %p147
    %p149 = pneg %p148
    // Predicated region
    $region9: #{conv1x1_bn_relu.1} parent=5 // pred_check
      _
    $region10: #{conv1x1_bn_relu.1} parent=5 // pred_check_branch
      %151 = sbr.rel (%p148) target = $region12
    $region11: #{conv1x1_bn_relu.1} parent=5 // pred_region
      %s152 = ssub.s32 %s9, 1
      // Predicated region
      $region13: #{conv1x1_bn_relu.1} parent=11 // pred_check
        %p153 = pneg %p82
      $region14: #{conv1x1_bn_relu.1} parent=11 // pred_check_branch
        %155 = sbr.rel (%p153) target = $region16
      $region15: #{conv1x1_bn_relu.1} parent=11 // pred_region
        %p156 = scmp.lt.s32.totalorder %s20, 0
        %s157 = scalar_select %p156, %s20, 0
        %s158 = smul.addr %s157, 8
        %s159 = scalar_lea.vmem %s1, %s158
      $region16: #{conv1x1_bn_relu.1} parent=11 // pred_fallthru
        _
      // Predicated region
      $region17: #{conv1x1_bn_relu.1} parent=11 // pred_check
        %p160 = pneg %p108
      $region18: #{conv1x1_bn_relu.1} parent=11 // pred_check_branch
        %162 = sbr.rel (%p160) target = $region20
      $region19: #{conv1x1_bn_relu.1} parent=11 // pred_region
        %p163 = scmp.lt.s32.totalorder %s20, 0
        %s164 = scalar_select %p163, %s20, 0
        %s165 = smul.addr %s164, 8
        %s166 = scalar_lea.vmem %s2, %s165
      $region20: #{conv1x1_bn_relu.1} parent=11 // pred_fallthru
        _
    $region12: #{conv1x1_bn_relu.1} parent=5 // pred_fallthru
      _
    %p167 = scmp.lt.s32.totalorder %s9, 2
    // Predicated region
    $region21: #{conv1x1_bn_relu.1} parent=5 // pred_check
      %p168 = pneg %p167
    $region22: #{conv1x1_bn_relu.1} parent=5 // pred_check_branch
      %170 = sbr.rel (%p168) target = $region24
    $region23: #{conv1x1_bn_relu.1} parent=5 // pred_region
      // Predicated region
      $region25: #{conv1x1_bn_relu.1} parent=23 // pred_check
        %p171 = pneg %p50
      $region26: #{conv1x1_bn_relu.1} parent=23 // pred_check_branch
        %173 = sbr.rel (%p171) target = $region28
      $region27: #{conv1x1_bn_relu.1} parent=23 // pred_region
        %s174 = smul.u32 2, %s18
        %p175 = scmp.lt.s32.totalorder %s16, 1
        %s176 = scalar_select %p175, %s16, 1
        %p177 = scmp.lt.s32.totalorder %s174, 1
        %s178 = scalar_select %p177, %s174, 1
        %s179 = smul.addr %s176, 2
        %s180 = sadd.s32 %s178, %s179
        %s181 = smul.addr %s180, 4
        %s182 = scalar_lea.vmem %s0, %s181
        %s183 = smul.u32 2, %s18
      $region28: #{conv1x1_bn_relu.1} parent=23 // pred_fallthru
        _
    $region24: #{conv1x1_bn_relu.1} parent=5 // pred_fallthru
      _
    %p184 = scmp.le.s32.totalorder 1, %s9
    %p185 = scmp.lt.s32.totalorder %s9, 3
    %p186 = pnand %p184, %p185
    %p187 = pneg %p186
    // Predicated region
    $region29: #{conv1x1_bn_relu.1} parent=5 // pred_check
      _
    $region30: #{conv1x1_bn_relu.1} parent=5 // pred_check_branch
      %189 = sbr.rel (%p186) target = $region32
    $region31: #{conv1x1_bn_relu.1} parent=5 // pred_region
      %s190 = ssub.s32 %s9, 1
      %s191 = smul.u32 2, %s21
      %p192 = scmp.lt.s32.totalorder %s19, 1
      %s193 = scalar_select %p192, %s19, 1
      %p194 = scmp.lt.s32.totalorder %s191, 1
      %s195 = scalar_select %p194, %s191, 1
      %s196 = smul.addr %s193, 2
      %s197 = sadd.s32 %s195, %s196
      %s198 = smul.addr %s197, 4
      %s199 = scalar_lea.vmem %s0, %s198
      %p200 = pneg %p56
      %p201 = pneg %p53
      %p202 = scmp.lt.s32.totalorder %s20, 0
      %s203 = scalar_select %p202, %s20, 0
      %s204 = smul.addr %s203, 8
      %s205 = scalar_lea.vmem %s1, %s204
      %p206 = pneg %p82
      %p207 = pneg %p79
      %p208 = scmp.lt.s32.totalorder %s20, 0
      %s209 = scalar_select %p208, %s20, 0
      %s210 = smul.addr %s209, 8
      %s211 = scalar_lea.vmem %s2, %s210
      %p212 = pneg %p108
      %p213 = pneg %p105
      %p214 = pneg %p138
      %p215 = pneg %p135
      %s216 = smul.u32 2, %s21
      %p217 = scmp.lt.s32.totalorder %s19, 1
      %s218 = scalar_select %p217, %s19, 1
      %p219 = scmp.lt.s32.totalorder %s20, 0
      %s220 = scalar_select %p219, %s20, 0
      %p221 = scmp.lt.s32.totalorder %s216, 1
      %s222 = scalar_select %p221, %s216, 1
      %s223 = smul.addr %s220, 2
      %s224 = sadd.s32 %s222, %s223
      %s225 = smul.addr %s218, 2
      %s226 = sadd.s32 %s224, %s225
      %s227 = smul.addr %s226, 8
      %s228 = scalar_lea.vmem %s3, %s227
      %s229 = smul.u32 2, %s21
      %p230 = scmp.lt.s32.totalorder %s19, 1
      %s231 = scalar_select %p230, %s19, 1
      %p232 = scmp.lt.s32.totalorder %s229, 1
      %s233 = scalar_select %p232, %s229, 1
      %s234 = smul.addr %s231, 2
      %s235 = sadd.s32 %s233, %s234
      %s236 = smul.addr %s235, 4
      %s237 = scalar_lea.vmem %s0, %s236
      %s238 = smul.u32 2, %s21
      %p239 = scmp.lt.s32.totalorder %s20, 0
      %s240 = scalar_select %p239, %s20, 0
      %s241 = smul.addr %s240, 8
      %s242 = scalar_lea.vmem %s1, %s241
      %p243 = scmp.lt.s32.totalorder %s20, 0
      %s244 = scalar_select %p243, %s20, 0
      %s245 = smul.addr %s244, 8
      %s246 = scalar_lea.vmem %s2, %s245
      %s247 = smul.u32 2, %s21
      %p248 = scmp.lt.s32.totalorder %s19, 1
      %s249 = scalar_select %p248, %s19, 1
      %p250 = scmp.lt.s32.totalorder %s20, 0
      %s251 = scalar_select %p250, %s20, 0
      %p252 = scmp.lt.s32.totalorder %s247, 1
      %s253 = scalar_select %p252, %s247, 1
      %s254 = smul.addr %s251, 2
      %s255 = sadd.s32 %s253, %s254
      %s256 = smul.addr %s249, 2
      %s257 = sadd.s32 %s255, %s256
      %s258 = smul.addr %s257, 8
      %s259 = scalar_lea.vmem %s3, %s258
      %s260 = smul.u32 2, %s21
      %v261 = vld [vmem:[%s242] sm:$0xff]
      %v262 = vld [vmem:[%s237] sm:$0xff]
      %v263 = vld [vmem:[%s246] sm:$0xff]
      %265 = vset.pattern.permute.xlu0 0
      %266 = vperm.xlu0 %265, %v263
      %v267 = vpop.permute.xlu0 %266
      %v270 = vcombine.high %v262, %v262
      %vm271 = vcmask 31744
      %v273 = vsel %vm271, %v261, 0
      %vm275 = vcmask 1043456
      %v276 = vsel %vm275, %v262, 0
      %v278 = vsel %vm275, %v270, 0
      %280 = vmatprep.subr.mxu0 0.0
      %281 = vmatpush1.msra.mxu0 0.0
      %282 = vmatprep.subr.mxu0 0.0
      %283 = vmatpush1.msra.mxu0 0.0
      %284 = vmatprep.subr.mxu0 0.0
      %285 = vmatpush1.msra.mxu0 0.0
      %286 = vmatprep.subr.mxu0 0.0
      %287 = vmatpush1.msra.mxu0 0.0
      %288 = vmatprep.subr.mxu0 0.0
      %289 = vmatpush1.msra.mxu0 0.0
      %290 = vmatprep.subr.mxu0 0.0
      %291 = vmatpush1.msra.mxu0 0.0
      %292 = vmatprep.subr.mxu0 0.0
      %293 = vmatpush1.msra.mxu0 0.0
      %294 = vmatprep.subr.mxu0 0.0
      %295 = vmatpush1.msra.mxu0 0.0
      %296 = vmatprep.subr.mxu0 0.0
      %297 = vmatpush1.msra.mxu0 0.0
      %298 = vmatprep.subr.mxu0 0.0
      %299 = vmatpush1.msra.mxu0 0.0
      %300 = vmatprep.subr.mxu0 0.0
      %301 = vmatpush1.msra.mxu0 0.0
      %302 = vmatprep.subr.mxu0 0.0
      %303 = vmatpush1.msra.mxu0 0.0
      %304 = vmatprep.subr.mxu0 0.0
      %305 = vmatpush1.msra.mxu0 0.0
      %306 = vmatprep.subr.mxu0 0.0
      %307 = vmatpush1.msra.mxu0 0.0
      %308 = vmatprep.subr.mxu0 0.0
      %309 = vmatpush1.msra.mxu0 0.0
      %310 = vmatprep.subr.mxu0 %v278
      %311 = vmatpush1.msra.mxu0 %v276
      %312 = vmatprep.subr.mxu0 0.0
      %313 = vmatpush2.msra.mxu0 0.0
      %314 = vmatprep.subr.mxu0 0.0
      %315 = vmatpush2.msra.mxu0 0.0
      %316 = vmatprep.subr.mxu0 0.0
      %317 = vmatpush2.msra.mxu0 0.0
      %318 = vmatprep.subr.mxu0 0.0
      %319 = vmatpush2.msra.mxu0 0.0
      %320 = vmatprep.subr.mxu0 0.0
      %321 = vmatpush2.msra.mxu0 0.0
      %322 = vmatprep.subr.mxu0 0.0
      %323 = vmatpush2.msra.mxu0 0.0
      %324 = vmatprep.subr.mxu0 0.0
      %325 = vmatpush2.msra.mxu0 0.0
      %326 = vmatprep.subr.mxu0 0.0
      %327 = vmatpush2.msra.mxu0 0.0
      %328 = vmatprep.subr.mxu0 0.0
      %329 = vmatpush2.msra.mxu0 0.0
      %330 = vmatprep.subr.mxu0 0.0
      %331 = vmatpush2.msra.mxu0 0.0
      %332 = vmatprep.subr.mxu0 0.0
      %333 = vmatpush2.msra.mxu0 0.0
      %334 = vmatprep.subr.mxu0 0.0
      %335 = vmatpush2.msra.mxu0 0.0
      %336 = vmatprep.subr.mxu0 0.0
      %337 = vmatpush2.msra.mxu0 0.0
      %338 = vmatprep.subr.mxu0 0.0
      %339 = vmatpush2.msra.mxu0 0.0
      %340 = vmatprep.subr.mxu0 0.0
      %341 = vmatpush2.msra.mxu0 0.0
      %342 = vmatprep.subr.mxu0 0.0
      %343 = vmatpush2.msra.mxu0 0.0
      %344 = vmatprep.mubr.f32.mxu0 0.0
      %345 = vmatmul.mubr.f32.gmra.mxu0 %v273
      %v346 = vpop.f32.mrf.mxu0
      %v347 = vadd.f32 %v267, %v346
      %v348 = vpop.f32.mrf.mxu0
      %v349 = vadd.f32 %v267, %v348
      %350 = vdwg.mxu0
      %v351 = vmax.f32 %v347, 0.0
      %v352 = vmax.f32 %v349, 0.0
      %353 = vst [vmem:[%s259] sm:$0xff] %v351
      %354 = vst [vmem:[%s259 + $0x8] sm:$0xff] %v352
      %s355 = smul.u32 2, %s21
      %p356 = scmp.lt.s32.totalorder %s19, 1
      %s357 = scalar_select %p356, %s19, 1
      %p358 = scmp.lt.s32.totalorder %s20, 0
      %s359 = scalar_select %p358, %s20, 0
      %p360 = scmp.lt.s32.totalorder %s355, 1
      %s361 = scalar_select %p360, %s355, 1
      %s362 = smul.addr %s359, 2
      %s363 = sadd.s32 %s361, %s362
      %s364 = smul.addr %s357, 2
      %s365 = sadd.s32 %s363, %s364
      %s366 = smul.addr %s365, 8
      %s367 = scalar_lea.vmem %s3, %s366
      // Predicated region
      $region33: #{conv1x1_bn_relu.1} parent=31 // pred_check
        %p368 = pneg %p135
      $region34: #{conv1x1_bn_relu.1} parent=31 // pred_check_branch
        %370 = sbr.rel (%p368) target = $region36
      $region35: #{conv1x1_bn_relu.1} parent=31 // pred_region
        %s371 = smul.u32 2, %s21
      $region36: #{conv1x1_bn_relu.1} parent=31 // pred_fallthru
        _
    $region32: #{conv1x1_bn_relu.1} parent=5 // pred_fallthru
      _
    %p372 = scmp.le.s32.totalorder 2, %s9
    // Predicated region
    $region37: #{conv1x1_bn_relu.1} parent=5 // pred_check
      %p373 = pneg %p372
    $region38: #{conv1x1_bn_relu.1} parent=5 // pred_check_branch
      %375 = sbr.rel (%p373) target = $region40
    $region39: #{conv1x1_bn_relu.1} parent=5 // pred_region
      %s376 = ssub.s32 %s9, 2
      // Predicated region
      $region41: #{conv1x1_bn_relu.1} parent=39 // pred_check
        %p377 = pneg %p141
      $region42: #{conv1x1_bn_relu.1} parent=39 // pred_check_branch
        %379 = sbr.rel (%p377) target = $region44
      $region43: #{conv1x1_bn_relu.1} parent=39 // pred_region
        %s380 = smul.u32 2, %s24
        %p381 = scmp.lt.s32.totalorder %s22, 1
        %s382 = scalar_select %p381, %s22, 1
        %p383 = scmp.lt.s32.totalorder %s23, 0
        %s384 = scalar_select %p383, %s23, 0
        %p385 = scmp.lt.s32.totalorder %s380, 1
        %s386 = scalar_select %p385, %s380, 1
        %s387 = smul.addr %s384, 2
        %s388 = sadd.s32 %s386, %s387
        %s389 = smul.addr %s382, 2
        %s390 = sadd.s32 %s388, %s389
        %s391 = smul.addr %s390, 8
        %s392 = scalar_lea.vmem %s3, %s391
      $region44: #{conv1x1_bn_relu.1} parent=39 // pred_fallthru
        _
    $region40: #{conv1x1_bn_relu.1} parent=5 // pred_fallthru
      _
  $region6: #{conv1x1_bn_relu.1} parent=0 // loop_footer
    %s13 = sadd.s32 1, %s9
  $region7: #{conv1x1_bn_relu.1} parent=0 // loop_footer_branch
    %8 = sbr.rel target = $region3
  $region8: #{conv1x1_bn_relu.1} parent=0 // loop_exit
    _

</llo_original>
